<compile_context>
chip_gen: v6e
topology: v6e:2x2x1
jax: 0.10.0
libtpu: 0.0.40
codegen_flags: <defaults>
</compile_context>

<pallas_src>
import functools
import math

import jax
import jax.numpy as jnp
from jax.experimental import pallas as pl
from jax.experimental.pallas import tpu as pltpu


def _round_up(a: int, m: int) -> int:
    return ((a + m - 1) // m) * m


def _cdiv(a: int, b: int) -> int:
    return -(-a // b)


def _spectral_norm_kernel(x_ref, w_ref, b_ref, o_ref):
    # One MXU matmul per (row tile, column tile), f32 accumulation, bias add,
    # cast on store.
    acc = jnp.dot(x_ref[...], w_ref[...], preferred_element_type=jnp.float32)
    o_ref[...] = (acc + b_ref[...]).astype(o_ref.dtype)


def _choose_fold(d: int, rows: int) -> int:
    """Fold factor k so that the kernel's last dim D = k*d is a multiple of 128.

    Only folds when the reshape (rows, d) -> (rows//k, k*d) is free
    (rows % k == 0), so no activation copy is ever required.
    """
    if d % 128 == 0 or rows == 0:
        return 1
    base = (128 * d) // math.gcd(128, d)  # lcm(d, 128)
    if base > 512:
        return 1
    # Prefer D=256 (fills the 256-wide MXU on v6e/v7x), then 128, then others.
    candidates = []
    for target in (256, 128, 384, 512, base):
        if target % base == 0 and (target // d) not in candidates:
            candidates.append(target // d)
    for k in candidates:
        if rows % k == 0:
            return k
    return 1


def _resident_spec(block_shape, index_map):
    """BlockSpec for a grid-invariant operand; single-buffered when supported."""
    try:
        return pl.BlockSpec(block_shape, index_map, pipeline_mode=pl.Buffered(1))
    except Exception:  # API without pipeline_mode: fall back to default buffering
        return pl.BlockSpec(block_shape, index_map)


@functools.partial(jax.jit, static_argnames=("standardize",))
def spectral_norm_forward(x, mean_x, u, x_M2, n, *, standardize=False):
    """Pallas implementation of SpectralNorm.forward.

    x:      [..., d]  input activations
    mean_x: [d]       running mean of X
    u:      [d, c]    orthonormal basis of the subspace to remove
    x_M2:   [d]       unnormalized second moment of X (only used if standardize)
    n:      scalar    number of samples seen (only used if standardize)
    """
    d, _c = u.shape
    orig_shape = x.shape
    assert orig_shape[-1] == d
    x2d = x.reshape(-1, d)
    rows = x2d.shape[0]
    if rows == 0:                      # degenerate: nothing to do
        return x

    # ---- Fused affine transform (tiny, f32, computed once outside the kernel) ----
    u32 = u.astype(jnp.float32)
    P = jnp.eye(d, dtype=jnp.float32) - u32 @ u32.T                  # (d, d)
    if standardize:
        scale = 1.0 / jnp.sqrt(x_M2.astype(jnp.float32) / n + 1e-5)  # (d,)
    else:
        scale = jnp.ones((d,), dtype=jnp.float32)
    W = scale[:, None] * P                                           # diag(scale) @ P
    b = -(mean_x.astype(jnp.float32) * scale) @ P                    # (d,)

    # ---- Lane-dense folding (metadata-only reshape, never a copy) ----
    k = _choose_fold(d, rows)
    D = k * d
    M = rows // k                                                    # super-rows
    if k > 1:
        W_big = jnp.kron(jnp.eye(k, dtype=jnp.float32), W)           # (D, D) block-diag
        b_big = jnp.tile(b, k)                                       # (D,)
    else:
        W_big, b_big = W, b
    xf = x2d.reshape(M, D)             # free: rows % k == 0 by construction

    # ---- Layout / dtype constants ----
    x_itemsize = jnp.dtype(x.dtype).itemsize
    w_itemsize = x_itemsize            # W is cast to x.dtype (single-dtype MXU path)
    sub = max(8, 32 // x_itemsize)     # sublane multiple: 8 f32, 16 bf16, 32 int8

    # ---- Honest VMEM budget, derived from the actual part ----
    try:
        vmem_cap = int(pltpu.get_tpu_info().vmem_capacity_bytes)
    except Exception:
        vmem_cap = 64 * 1024 * 1024    # conservative fallback (v7x per-TC VMEM)
    vmem_limit = min(int(vmem_cap * 0.75), 100 * 1024 * 1024)
    budget = int(vmem_limit * 0.85)

    # W resident vs. column-tiled (large-d path).
    w_whole_fits = D * D * w_itemsize <= budget // 4
    if w_whole_fits:
        tn = D
    else:
        # TODO(synk): for extremely large d a K-axis with an f32 accumulator
        # (pl.when init/finalize) would also be needed; column tiling only here.
        tn = max(128, ((budget // 8) // (D * w_itemsize)) // 128 * 128)
        tn = min(tn, _round_up(D, 128))
    # Budget W conservatively as double-buffered even when we request Buffered(1).
    w_resident = 2 * D * tn * w_itemsize + 2 * tn * 4
    # Per super-row: double-buffered x tile + double-buffered out tile + f32 temps.
    per_row = (2 * D + 2 * tn) * x_itemsize + 2 * tn * 4
    tm_cap = max(sub, (budget - w_resident) // per_row)

    if M >= 4 * sub:
        # >= 4 grid steps on the row axis (2+ pipelined steps per v7x TensorCore).
        tm = min(tm_cap, _round_up(_cdiv(M, 4), sub))
        tm = max(sub, (tm // sub) * sub)
    elif tm_cap >= M:
        tm = M                          # single full-extent block (always legal)
    else:
        tm = max(sub, (tm_cap // sub) * sub)

    gm = _cdiv(M, tm)
    gn = _cdiv(D, tn)

    w_in = W_big.astype(x.dtype)                       # single-dtype MXU path
    b_in = b_big.reshape(1, D).astype(jnp.float32)     # bias stays f32 for the add

    if w_whole_fits:
        w_spec = _resident_spec((D, tn), lambda i, j: (0, j))
        b_spec = _resident_spec((1, tn), lambda i, j: (0, j))
    else:
        w_spec = pl.BlockSpec((D, tn), lambda i, j: (0, j))
        b_spec = pl.BlockSpec((1, tn), lambda i, j: (0, j))

    cost = pl.CostEstimate(
        flops=2 * M * D * D,
        transcendentals=0,
        bytes_accessed=2 * M * D * x_itemsize + D * D * w_itemsize + D * 4,
    )

    out = pl.pallas_call(
        _spectral_norm_kernel,
        out_shape=jax.ShapeDtypeStruct((M, D), x.dtype),
        grid_spec=pltpu.PrefetchScalarGridSpec(
            num_scalar_prefetch=0,
            grid=(gm, gn),
            in_specs=[
                pl.BlockSpec((tm, D), lambda i, j: (i, 0)),   # x super-row tile
                w_spec,                                        # fused W
                b_spec,                                        # fused bias
            ],
            out_specs=pl.BlockSpec((tm, tn), lambda i, j: (i, j)),
        ),
        compiler_params=pltpu.CompilerParams(
            dimension_semantics=("parallel", "arbitrary"),
            vmem_limit_bytes=vmem_limit,
        ),
        cost_estimate=cost,
    )(xf, w_in, b_in)

    # out has exactly rows*d elements; reshape back is free (no slicing/copies).
    return out.reshape(orig_shape)


def _reference_forward(x, mean_x, u, x_M2, n, standardize=False):
    x = x.astype(jnp.float32)
    mean_x = mean_x.astype(jnp.float32)
    u = u.astype(jnp.float32)
    x_M2 = x_M2.astype(jnp.float32)
    x_ = x - mean_x
    if standardize:
        x_ = x_ / jnp.sqrt(x_M2 / n + 1e-5)
    return x_ - (x_ @ u) @ u.T


def _make_case(key, x_shape, d, c, dtype):
    k_x, k_mean, k_u, k_m2 = jax.random.split(key, 4)
    x = jax.random.normal(k_x, x_shape, dtype=jnp.float32).astype(dtype)
    mean_x = (0.1 * jax.random.normal(k_mean, (d,), dtype=jnp.float32)).astype(dtype)
    raw_u = jax.random.normal(k_u, (d, c), dtype=jnp.float32)
    u, _ = jnp.linalg.qr(raw_u)               # stands in for update()'s SVD/normalize
    u = u.astype(dtype)
    n = jnp.array(128.0, dtype=jnp.float32)
    x_M2 = (n * (0.5 + jax.random.uniform(k_m2, (d,), dtype=jnp.float32))).astype(dtype)
    return x, mean_x, u, x_M2, n


if __name__ == "__main__":
    # TODO(synk): update() (running-moment accumulation + low-rank SVD) is a
    # stateful training-time op and is not part of the forward kernel.
    key = jax.random.PRNGKey(0)

    cases = [
        # (x_shape, num_features, num_classes, dtype, atol, rtol)
        ((2, 8, 32), 32, 4, jnp.float32, 1e-4, 1e-4),      # folded lane-dense path (D=256)
        ((4, 25, 32), 32, 4, jnp.float32, 1e-4, 1e-4),     # folded, non-power-of-two row count
        ((70, 96), 96, 3, jnp.float32, 1e-4, 1e-4),        # awkward d: no fold + ragged row tiles
        ((3, 16, 64), 64, 4, jnp.bfloat16, 1.5e-1, 5e-2),  # bf16 inputs, folded path
    ]

    for idx, (shape, d, c, dtype, atol, rtol) in enumerate(cases):
        key, subkey = jax.random.split(key)
        x, mean_x, u, x_M2, n = _make_case(subkey, shape, d, c, dtype)
        for standardize in (False, True):
            out = spectral_norm_forward(x, mean_x, u, x_M2, n, standardize=standardize)
            out = jax.block_until_ready(out)
            ref = _reference_forward(x, mean_x, u, x_M2, n, standardize=standardize)
            assert out.shape == x.shape and out.dtype == x.dtype
            assert jnp.allclose(out.astype(jnp.float32), ref, atol=atol, rtol=rtol), (
                f"mismatch: case={idx} shape={shape} dtype={dtype} standardize={standardize}")

    print("KERNEL_OK")
</pallas_src>

<mosaic_0001>
module attributes {stable_mosaic.version = 11 : i64} {
  func.func @_spectral_norm_kernel(%arg0: i32, %arg1: i32, %arg2: memref<2x256xf32, #tpu.memory_space<vmem>>, %arg3: memref<256x256xf32, #tpu.memory_space<vmem>>, %arg4: memref<1x256xf32, #tpu.memory_space<vmem>>, %arg5: memref<2x256xf32, #tpu.memory_space<vmem>>) attributes {dimension_semantics = [#tpu.dimension_semantics<parallel>, #tpu.dimension_semantics<arbitrary>], iteration_bounds = array<i64: 1, 1>, scalar_prefetch = 0 : i64, scratch_operands = 0 : i64, tpu.core_type = #tpu.core_type<tc>, window_params = [{transform_indices = @transform_0, window_bounds = array<i64: 2, 256>}, {pipeline_mode = #tpu.pipeline_mode<synchronous>, transform_indices = @transform_1, window_bounds = array<i64: 256, 256>}, {pipeline_mode = #tpu.pipeline_mode<synchronous>, transform_indices = @transform_2, window_bounds = array<i64: 1, 256>}, {transform_indices = @transform_3, window_bounds = array<i64: 2, 256>}]} {
    %c0 = arith.constant 0 : index
    %c0_0 = arith.constant 0 : index
    %0 = vector.load %arg2[%c0, %c0_0] : memref<2x256xf32, #tpu.memory_space<vmem>>, vector<2x256xf32>
    %c0_1 = arith.constant 0 : index
    %c0_2 = arith.constant 0 : index
    %1 = vector.load %arg3[%c0_1, %c0_2] : memref<256x256xf32, #tpu.memory_space<vmem>>, vector<256x256xf32>
    %cst = arith.constant dense<0.000000e+00> : vector<2x256xf32>
    %2 = tpu.matmul %0, %1, %cst {dimension_numbers = #tpu.dot_dimension_numbers<[1], [0], [0], [1], [0, 0, 1, 1], [], []>} : vector<2x256xf32>, vector<256x256xf32>, vector<2x256xf32> -> vector<2x256xf32>
    %c0_3 = arith.constant 0 : index
    %c0_4 = arith.constant 0 : index
    %3 = vector.load %arg4[%c0_3, %c0_4] : memref<1x256xf32, #tpu.memory_space<vmem>>, vector<1x256xf32>
    %4 = vector.broadcast %3 : vector<1x256xf32> to vector<2x256xf32>
    %5 = arith.addf %2, %4 : vector<2x256xf32>
    %c0_5 = arith.constant 0 : index
    %c0_6 = arith.constant 0 : index
    %6 = vector.load %arg5[%c0_5, %c0_6] : memref<2x256xf32, #tpu.memory_space<vmem>>, vector<2x256xf32>
    tpu.vector_store %arg5[%c0_5, %c0_6], %5 {strides = array<i32>} : memref<2x256xf32, #tpu.memory_space<vmem>>, vector<2x256xf32>,
    return
  }
  func.func @transform_0(%arg0: i32, %arg1: i32) -> (i32, i32) {
    %c0_i32 = arith.constant 0 : i32
    %c0_i32_0 = arith.constant 0 : i32
    return %arg0, %c0_i32 : i32, i32
  }
  func.func @transform_1(%arg0: i32, %arg1: i32) -> (i32, i32) {
    %c0_i32 = arith.constant 0 : i32
    %c0_i32_0 = arith.constant 0 : i32
    return %c0_i32, %arg1 : i32, i32
  }
  func.func @transform_2(%arg0: i32, %arg1: i32) -> (i32, i32) {
    %c0_i32 = arith.constant 0 : i32
    %c0_i32_0 = arith.constant 0 : i32
    return %c0_i32, %arg1 : i32, i32
  }
  func.func @transform_3(%arg0: i32, %arg1: i32) -> (i32, i32) {
    %c0_i32 = arith.constant 0 : i32
    return %arg0, %arg1 : i32, i32
  }
}

</mosaic_0001>

<llo_original>
// kernel: neg.1
$region0: #{neg.1}
  #allocation0 [shape = 's32[1]{0}', space=sflag, size = 0x4, scoped, tag = 'scoped memory for neg.1']
  %s0 = inlined_call_operand.vmem [shape: f32[32], index: 0, kind: input, shape index: {}]
  %s1 = inlined_call_operand.vmem [shape: f32[32], index: 1, kind: output, shape index: {}]
  %v2 = vld [vmem:[%s0] sm:$0x1]
  %3 = xla_tuple %v2
  %4 = xla_tuple %3
  %v5 = vxor.u32 %v2, 2147483648
  %6 = xla_tuple %v5
  %7 = vst [vmem:[%s1] sm:$0x1] %v5

// kernel: tile.9
$region0: #{tile.9}
  %s0 = inlined_call_operand.vmem [shape: f32[8,32], index: 0, kind: input, shape index: {}]
  %s1 = inlined_call_operand.vmem [shape: f32[1,256], index: 1, kind: output, shape index: {}]
  $region1: #{tile.9} parent=0
    #allocation0 [shape = 'u8[8192]{0}', space=vmem, size = 0x2000, scoped, tag = 'scoped mem for output reshape']
    %s2 = smov 3
    %v3 = vld [vmem:[%s0] ss:$4 sm:%s2]
    %vm4 = vcmask 261120
    %5 = vst.msk [vmem:[#allocation0] ss:$8 sm:$0x3] %vm4, %v3
    %s6 = scalar_lea.vmem %s0, 3
    %s7 = smov 3
    %v8 = vld [vmem:[%s6] ss:$4 sm:%s7]
    %9 = vrot.lane.b32.xlu0 %v8, 96
    %v10 = vpop.permute.xlu0 %9
    %vm11 = vcmask 1048320
    %12 = vst.msk [vmem:[#allocation0] ss:$8 sm:$0x3] %vm11, %v10
    %s13 = scalar_lea.vmem %s0, 2
    %s14 = smov 3
    %v15 = vld [vmem:[%s13] ss:$4 sm:%s14]
    %16 = vrot.lane.b32.xlu0 %v15, 64
    %v17 = vpop.permute.xlu0 %16
    %vm18 = vcmask 785920
    %19 = vst.msk [vmem:[#allocation0] ss:$8 sm:$0x3] %vm18, %v17
    %s20 = scalar_lea.vmem %s0, 1
    %s21 = smov 3
    %v22 = vld [vmem:[%s20] ss:$4 sm:%s21]
    %23 = vrot.lane.b32.xlu0 %v22, 32
    %v24 = vpop.permute.xlu0 %23
    %vm25 = vcmask 523520
    %26 = vst.msk [vmem:[#allocation0] ss:$8 sm:$0x3] %vm25, %v24
    %s28 = sshll.u32 1, 1
    %s29 = ssub.s32 %s28, 1
    %v31 = vld [vmem:[#allocation0] sm:%s29]
    %s32 = sshll.u32 1, 1
    %s33 = ssub.s32 %s32, 1
    %34 = vst [vmem:[%s1] sm:%s33] %v31
    %s35 = scalar_lea.vmem [#allocation0], 8
    %v36 = vld [vmem:[%s35] sm:%s29]
    %s37 = sshll.u32 1, 1
    %s38 = ssub.s32 %s37, 1
    %s39 = scalar_lea.vmem %s1, 1
    %40 = vst [vmem:[%s39] sm:%s38] %v36

// kernel: tile.8
$region0: #{tile.8}
  #allocation0 [shape = 's32[1]{0}', space=sflag, size = 0x4, scoped, tag = 'scoped memory for tile.8']
  %s0 = inlined_call_operand.vmem [shape: f32[32], index: 0, kind: input, shape index: {}]
  %s1 = inlined_call_operand.vmem [shape: f32[8,32], index: 1, kind: output, shape index: {}]
  // Predicated region
  $region2: #{tile.8} parent=0 // pred_check
    _
  $region3: #{tile.8} parent=0 // pred_check_branch
    %3 = sbr.rel (0) target = $region5
  $region4: #{tile.8} parent=0 // pred_region
    _
  $region5: #{tile.8} parent=0 // pred_fallthru
    _
  %v4 = vld [vmem:[%s0] ss:$0 sm:$0xff]
  %5 = vst [vmem:[%s1] sm:$0xff] %v4

// kernel: spectral_norm_forward.1
$region0: #{spectral_norm_forward.1}
  #allocation0 [shape = 'u32[]', space=smem, size = 0x4, offset = 0x4, fixed_abs, tag = 'smem constant byte address 0x4 - core index']
  #allocation1 [shape = 'u32[144,128]{1,0:T(1,128)}', space=vmem, size = 0x12000, scoped, tag = 'internal scratch']
  %s0 = inlined_call_operand.vmem [shape: f32[2,256], index: 0, kind: input, shape index: {}]
  %s1 = inlined_call_operand.vmem [shape: f32[256,256], index: 1, kind: input, shape index: {}]
  %s2 = inlined_call_operand.vmem [shape: f32[1,256], index: 2, kind: input, shape index: {}]
  %s3 = inlined_call_operand.vmem [shape: f32[2,256], index: 3, kind: output, shape index: {}]
  %s4 = sld [smem:[#allocation0]]
  $region22: #{spectral_norm_forward.1} parent=0
    _
  %s6 = ssub.s32 1, %s4
  %s7 = scalar_select 0, %s6, %s4
  // Predicated region
  $region2: #{spectral_norm_forward.1} parent=0 // pred_check
    _
  $region3: #{spectral_norm_forward.1} parent=0 // pred_check_branch
    %9 = sbr.rel (0) target = $region5
  $region4: #{spectral_norm_forward.1} parent=0 // pred_region
    _
  $region5: #{spectral_norm_forward.1} parent=0 // pred_fallthru
    _
  // Predicated region
  $region6: #{spectral_norm_forward.1} parent=0 // pred_check
    _
  $region7: #{spectral_norm_forward.1} parent=0 // pred_check_branch
    %11 = sbr.rel (0) target = $region9
  $region8: #{spectral_norm_forward.1} parent=0 // pred_region
    _
  $region9: #{spectral_norm_forward.1} parent=0 // pred_fallthru
    _
  // Predicated region
  $region10: #{spectral_norm_forward.1} parent=0 // pred_check
    _
  $region11: #{spectral_norm_forward.1} parent=0 // pred_check_branch
    %13 = sbr.rel (0) target = $region13
  $region12: #{spectral_norm_forward.1} parent=0 // pred_region
    _
  $region13: #{spectral_norm_forward.1} parent=0 // pred_fallthru
    _
  %v14 = vld [vmem:[%s0] sm:$0xf]
  %v15 = vld [vmem:[%s1] sm:$0xff]
  %v16 = vld [vmem:[%s1 + $0x8] sm:$0xff]
  %v17 = vld [vmem:[%s1 + $0x10] sm:$0xff]
  %v18 = vld [vmem:[%s1 + $0x18] sm:$0xff]
  %v19 = vld [vmem:[%s1 + $0x20] sm:$0xff]
  %v20 = vld [vmem:[%s1 + $0x28] sm:$0xff]
  %v21 = vld [vmem:[%s1 + $0x30] sm:$0xff]
  %v22 = vld [vmem:[%s1 + $0x38] sm:$0xff]
  %v23 = vld [vmem:[%s1 + $0x40] sm:$0xff]
  %v24 = vld [vmem:[%s1 + $0x48] sm:$0xff]
  %v25 = vld [vmem:[%s1 + $0x50] sm:$0xff]
  %v26 = vld [vmem:[%s1 + $0x58] sm:$0xff]
  %v27 = vld [vmem:[%s1 + $0x60] sm:$0xff]
  %v28 = vld [vmem:[%s1 + $0x68] sm:$0xff]
  %v29 = vld [vmem:[%s1 + $0x70] sm:$0xff]
  %v30 = vld [vmem:[%s1 + $0x78] sm:$0xff]
  %v31 = vld [vmem:[%s1 + $0x80] sm:$0xff]
  %v32 = vld [vmem:[%s1 + $0x88] sm:$0xff]
  %v33 = vld [vmem:[%s1 + $0x90] sm:$0xff]
  %v34 = vld [vmem:[%s1 + $0x98] sm:$0xff]
  %v35 = vld [vmem:[%s1 + $0xa0] sm:$0xff]
  %v36 = vld [vmem:[%s1 + $0xa8] sm:$0xff]
  %v37 = vld [vmem:[%s1 + $0xb0] sm:$0xff]
  %v38 = vld [vmem:[%s1 + $0xb8] sm:$0xff]
  %v39 = vld [vmem:[%s1 + $0xc0] sm:$0xff]
  %v40 = vld [vmem:[%s1 + $0xc8] sm:$0xff]
  %v41 = vld [vmem:[%s1 + $0xd0] sm:$0xff]
  %v42 = vld [vmem:[%s1 + $0xd8] sm:$0xff]
  %v43 = vld [vmem:[%s1 + $0xe0] sm:$0xff]
  %v44 = vld [vmem:[%s1 + $0xe8] sm:$0xff]
  %v45 = vld [vmem:[%s1 + $0xf0] sm:$0xff]
  %v46 = vld [vmem:[%s1 + $0xf8] sm:$0xff]
  %v47 = vld [vmem:[%s1 + $0x100] sm:$0xff]
  %v48 = vld [vmem:[%s1 + $0x108] sm:$0xff]
  %v49 = vld [vmem:[%s1 + $0x110] sm:$0xff]
  %v50 = vld [vmem:[%s1 + $0x118] sm:$0xff]
  %v51 = vld [vmem:[%s1 + $0x120] sm:$0xff]
  %v52 = vld [vmem:[%s1 + $0x128] sm:$0xff]
  %v53 = vld [vmem:[%s1 + $0x130] sm:$0xff]
  %v54 = vld [vmem:[%s1 + $0x138] sm:$0xff]
  %v55 = vld [vmem:[%s1 + $0x140] sm:$0xff]
  %v56 = vld [vmem:[%s1 + $0x148] sm:$0xff]
  %v57 = vld [vmem:[%s1 + $0x150] sm:$0xff]
  %v58 = vld [vmem:[%s1 + $0x158] sm:$0xff]
  %v59 = vld [vmem:[%s1 + $0x160] sm:$0xff]
  %v60 = vld [vmem:[%s1 + $0x168] sm:$0xff]
  %v61 = vld [vmem:[%s1 + $0x170] sm:$0xff]
  %v62 = vld [vmem:[%s1 + $0x178] sm:$0xff]
  %v63 = vld [vmem:[%s1 + $0x180] sm:$0xff]
  %v64 = vld [vmem:[%s1 + $0x188] sm:$0xff]
  %v65 = vld [vmem:[%s1 + $0x190] sm:$0xff]
  %v66 = vld [vmem:[%s1 + $0x198] sm:$0xff]
  %v67 = vld [vmem:[%s1 + $0x1a0] sm:$0xff]
  %v68 = vld [vmem:[%s1 + $0x1a8] sm:$0xff]
  %v69 = vld [vmem:[%s1 + $0x1b0] sm:$0xff]
  %v70 = vld [vmem:[%s1 + $0x1b8] sm:$0xff]
  %v71 = vld [vmem:[%s1 + $0x1c0] sm:$0xff]
  %v72 = vld [vmem:[%s1 + $0x1c8] sm:$0xff]
  %v73 = vld [vmem:[%s1 + $0x1d0] sm:$0xff]
  %v74 = vld [vmem:[%s1 + $0x1d8] sm:$0xff]
  %v75 = vld [vmem:[%s1 + $0x1e0] sm:$0xff]
  %v76 = vld [vmem:[%s1 + $0x1e8] sm:$0xff]
  %v77 = vld [vmem:[%s1 + $0x1f0] sm:$0xff]
  %v78 = vld [vmem:[%s1 + $0x1f8] sm:$0xff]
  %v79 = vld [vmem:[%s2] sm:$0x3]
  %v81 = vlaneseq
  %v82 = vshrl.u32 %v81, 7
  %v83 = vsub.s32 0, %v82
  %v84 = vrot.slane %v79, %v83
  %v85 = vlaneseq
  %v86 = vshrl.u32 %v85, 7
  %v87 = vsub.s32 1, %v86
  %v88 = vrot.slane %v79, %v87
  %v93 = vunpack.c.l.s4 1983009808
  %v94 = vunpack.c.0.s8 %v93
  %v95 = vlaneseq
  %v96 = vshrl.u32 %v95, 7
  %v97 = vsub.s32 %v94, %v96
  %v98 = vrot.slane %v14, %v97
  %v99 = vcombine.high %v98, %v98
  %102 = vmatprep.subr.mxu0 %v46
  %103 = vmatpush1.msra.mxu0 %v45
  %104 = vmatprep.subr.mxu0 %v44
  %105 = vmatpush1.msra.mxu0 %v43
  %106 = vmatprep.subr.mxu0 %v42
  %107 = vmatpush1.msra.mxu0 %v41
  %108 = vmatprep.subr.mxu0 %v40
  %109 = vmatpush1.msra.mxu0 %v39
  %110 = vmatprep.subr.mxu0 %v38
  %111 = vmatpush1.msra.mxu0 %v37
  %112 = vmatprep.subr.mxu0 %v36
  %113 = vmatpush1.msra.mxu0 %v35
  %114 = vmatprep.subr.mxu0 %v34
  %115 = vmatpush1.msra.mxu0 %v33
  %116 = vmatprep.subr.mxu0 %v32
  %117 = vmatpush1.msra.mxu0 %v31
  %118 = vmatprep.subr.mxu0 %v30
  %119 = vmatpush1.msra.mxu0 %v29
  %120 = vmatprep.subr.mxu0 %v28
  %121 = vmatpush1.msra.mxu0 %v27
  %122 = vmatprep.subr.mxu0 %v26
  %123 = vmatpush1.msra.mxu0 %v25
  %124 = vmatprep.subr.mxu0 %v24
  %125 = vmatpush1.msra.mxu0 %v23
  %126 = vmatprep.subr.mxu0 %v22
  %127 = vmatpush1.msra.mxu0 %v21
  %128 = vmatprep.subr.mxu0 %v20
  %129 = vmatpush1.msra.mxu0 %v19
  %130 = vmatprep.subr.mxu0 %v18
  %131 = vmatpush1.msra.mxu0 %v17
  %132 = vmatprep.subr.mxu0 %v16
  %133 = vmatpush1.msra.mxu0 %v15
  %134 = vmatprep.subr.mxu0 %v78
  %135 = vmatpush2.msra.mxu0 %v77
  %136 = vmatprep.subr.mxu0 %v76
  %137 = vmatpush2.msra.mxu0 %v75
  %138 = vmatprep.subr.mxu0 %v74
  %139 = vmatpush2.msra.mxu0 %v73
  %140 = vmatprep.subr.mxu0 %v72
  %141 = vmatpush2.msra.mxu0 %v71
  %142 = vmatprep.subr.mxu0 %v70
  %143 = vmatpush2.msra.mxu0 %v69
  %144 = vmatprep.subr.mxu0 %v68
  %145 = vmatpush2.msra.mxu0 %v67
  %146 = vmatprep.subr.mxu0 %v66
  %147 = vmatpush2.msra.mxu0 %v65
  %148 = vmatprep.subr.mxu0 %v64
  %149 = vmatpush2.msra.mxu0 %v63
  %150 = vmatprep.subr.mxu0 %v62
  %151 = vmatpush2.msra.mxu0 %v61
  %152 = vmatprep.subr.mxu0 %v60
  %153 = vmatpush2.msra.mxu0 %v59
  %154 = vmatprep.subr.mxu0 %v58
  %155 = vmatpush2.msra.mxu0 %v57
  %156 = vmatprep.subr.mxu0 %v56
  %157 = vmatpush2.msra.mxu0 %v55
  %158 = vmatprep.subr.mxu0 %v54
  %159 = vmatpush2.msra.mxu0 %v53
  %160 = vmatprep.subr.mxu0 %v52
  %161 = vmatpush2.msra.mxu0 %v51
  %162 = vmatprep.subr.mxu0 %v50
  %163 = vmatpush2.msra.mxu0 %v49
  %164 = vmatprep.subr.mxu0 %v48
  %165 = vmatpush2.msra.mxu0 %v47
  %166 = vmatprep.mubr.f32.mxu0 %v99
  %167 = vmatmul.mubr.f32.gmra.mxu0 %v98
  %v168 = vpop.f32.mrf.mxu0
  %v169 = vadd.f32 %v84, %v168
  %v170 = vpop.f32.mrf.mxu0
  %v171 = vadd.f32 %v88, %v170
  %172 = vdwg.mxu0
  %v175 = vcombine.low %v169, %v171
  %v177 = vunpack.c.l.s4 1983009808
  %v178 = vunpack.c.0.s8 %v177
  %v179 = vlaneseq
  %v180 = vshrl.u32 %v179, 7
  %v181 = vsub.s32 %v178, %v180
  %v182 = vrot.slane %v175, %v181
  %184 = vst [vmem:[%s3] sm:$0xf] %v182
  // Predicated region
  $region14: #{spectral_norm_forward.1} parent=0 // pred_check
    _
  $region15: #{spectral_norm_forward.1} parent=0 // pred_check_branch
    %186 = sbr.rel (0) target = $region17
  $region16: #{spectral_norm_forward.1} parent=0 // pred_region
    _
  $region17: #{spectral_norm_forward.1} parent=0 // pred_fallthru
    _
  // Predicated region
  $region18: #{spectral_norm_forward.1} parent=0 // pred_check
    _
  $region19: #{spectral_norm_forward.1} parent=0 // pred_check_branch
    %188 = sbr.rel (0) target = $region21
  $region20: #{spectral_norm_forward.1} parent=0 // pred_region
    _
  $region21: #{spectral_norm_forward.1} parent=0 // pred_fallthru
    _

</llo_original>
